<compile_context>
chip_gen: v7x
topology: tpu7x:2x2x1
jax: 0.10.0
libtpu: 0.0.40
codegen_flags: <defaults>
</compile_context>

<pallas_src>
import numpy as np
import jax
import jax.numpy as jnp
from jax.experimental import pallas as pl
from jax.experimental.pallas import tpu as pltpu


# ----------------------------------------------------------------------------
# Constant-matrix builders (plain numpy, executed once at build time).
# ----------------------------------------------------------------------------
def conv_matrix(w, L_in, stride, padding):
    w = np.asarray(w, np.float32)
    k = w.shape[0]
    L_out = (L_in + 2 * padding - k) // stride + 1
    W = np.zeros((L_in, L_out), np.float32)
    for l in range(L_out):
        for m in range(k):
            p = stride * l + m - padding
            if 0 <= p < L_in:
                W[p, l] += w[m]
    return W


def pool_matrix(L_in, k, stride, padding):
    """Concatenated one-hot selection matrix, shape (L_in, k*L_out)."""
    L_out = (L_in + 2 * padding - k) // stride + 1
    S = np.zeros((L_in, k * L_out), np.float32)
    for m in range(k):
        for l in range(L_out):
            p = stride * l + m - padding
            if 0 <= p < L_in:
                S[p, m * L_out + l] = 1.0
    return S, L_out


# ----------------------------------------------------------------------------
# Builder: precompute constants once, return a jitted forward function.
# ----------------------------------------------------------------------------
def make_time_graph_net(params, bs, n_nodes, T):
    R = bs * n_nodes
    K0 = 10                                               # conv0 kernel size

    # Length chain 1200 -> 150 -> 30 -> 10 -> 4 -> 1 (fixed by the module).
    L1 = (T + 2 * 1 - K0) // 8 + 1                        # 150
    P1K = 5
    L2 = (L1 - P1K) // P1K + 1                            # 30
    W2 = conv_matrix(params["w2"], L2, stride=3, padding=0)   # (30, 10)
    L3 = W2.shape[1]                                      # 10
    S3, L4 = pool_matrix(L3, k=3, stride=3, padding=1)    # (10, 12), 4
    assert (L1, L2, L3, L4) == (150, 30, 10, 4)
    assert L1 == P1K * L2

    # Fold MaxPool2's one-hot/zero selection into conv2 (valid because ReLU
    # commutes with one-hot selection and ReLU(0)=0 for the padded columns;
    # every pool window holds >=1 valid post-ReLU (>=0) element, so the zero
    # padding matches PyTorch's -inf padding).
    W23 = (W2 @ S3).astype(np.float32)                    # (30, 12)
    b23 = (float(params["b2"]) * S3.sum(axis=0)).astype(np.float32)  # (12,)

    Wl = np.asarray(params["Wl"], np.float32)             # (3, N)
    bl = np.asarray(params["bl"], np.float32)             # (3,)

    # ONE combined VMEM constant slab: W23 | b23 | bl | Wl.T.
    CROWS = 32 + n_nodes
    C = np.zeros((CROWS, 3 * L4), np.float32)             # (40, 12)
    C[0:L2, :] = W23
    C[30, :] = b23
    C[31, 0:3] = bl
    C[32:32 + n_nodes, 0:3] = Wl.T

    # ONE SMEM scalar vector: [w0 (10), b0, w4 (4), b4].
    scal = np.zeros((16,), np.float32)
    scal[0:K0] = np.asarray(params["w0"], np.float32)
    scal[K0] = float(params["b0"])
    scal[11:15] = np.asarray(params["w4"], np.float32)
    scal[15] = float(params["b4"])

    # ------------------------------------------------------------------------
    # Pallas kernel: whole time-conv chain + classifier head, one invocation.
    # ------------------------------------------------------------------------
    def tgn_kernel(xs_ref, c_ref, s_ref, out_ref):
        # --- Conv1d(1,1,k=10,s=8,p=1) + ReLU, entirely on the VPU ------------
        # xs_ref[m][:, mm*L2 + l'] == x_pad[:, 8*(5*l' + mm) + m]  (permuted so
        # MaxPool1 window members sit in contiguous lane slices of h1).
        terms = [s_ref[m] * xs_ref[m] for m in range(K0)]
        # Binary-tree accumulate (depth 4) instead of a 9-deep serial chain.
        while len(terms) > 1:
            nxt = [terms[i] + terms[i + 1] for i in range(0, len(terms) - 1, 2)]
            if len(terms) % 2:
                nxt.append(terms[-1])
            terms = nxt
        h1 = jnp.maximum(terms[0] + s_ref[K0], 0.0)       # (R, 150)

        # --- MaxPool1d(k=5,s=5,p=0) (+ReLU identity): VPU max over slices ----
        p = h1[:, 0:L2]
        for mm in range(1, P1K):
            p = jnp.maximum(p, h1[:, mm * L2:(mm + 1) * L2])
        h2 = p                                            # (R, 30)

        # --- Conv1d(k=3,s=3) + ReLU fused with MaxPool2 selection (MXU) ------
        w23 = c_ref[0:L2, :]                              # (30, 12)
        b23r = c_ref[30:31, :]                            # (1, 12)
        qcat = jnp.maximum(
            jnp.dot(h2, w23, preferred_element_type=jnp.float32) + b23r,
            0.0)                                          # (R, 12)

        # --- MaxPool1d(k=3,s=3,p=1) (+ReLU identity): VPU max over slices ----
        h4 = jnp.maximum(jnp.maximum(qcat[:, 0:L4], qcat[:, L4:2 * L4]),
                         qcat[:, 2 * L4:3 * L4])          # (R, 4)

        # --- Conv1d(k=4,s=1,p=0) + ReLU on the VPU (4 scalar MACs) -----------
        h5 = jnp.maximum(
            s_ref[11] * h4[:, 0:1] + s_ref[12] * h4[:, 1:2]
            + s_ref[13] * h4[:, 2:3] + s_ref[14] * h4[:, 3:4] + s_ref[15],
            0.0)                                          # (R, 1)

        # --- Linear(n_nodes -> 3) + Softmax, no MXU --------------------------
        # logits[b, c] = sum_j h5[b*N + j] * Wl[c, j] + bl[c]
        wlt = c_ref[32:32 + n_nodes, 0:3]                 # (N, 3) == Wl.T
        blr = c_ref[31:32, 0:3]                           # (1, 3)
        for b in range(bs):
            fb = h5[b * n_nodes:(b + 1) * n_nodes, :]     # (N, 1)
            row = jnp.sum(fb * wlt, axis=0, keepdims=True) + blr   # (1, 3)
            z = row - jnp.max(row, axis=1, keepdims=True)
            e = jnp.exp(z)
            out_ref[b:b + 1, :] = e / jnp.sum(e, axis=1, keepdims=True)

    vmem = pl.BlockSpec(memory_space=pltpu.MemorySpace.VMEM)
    smem = pl.BlockSpec(memory_space=pltpu.MemorySpace.SMEM)

    kern = pl.pallas_call(
        tgn_kernel,
        out_shape=jax.ShapeDtypeStruct((bs, 3), jnp.float32),
        in_specs=[vmem, vmem, smem],
        out_specs=vmem,
    )

    Cj = jnp.asarray(C)
    scalj = jnp.asarray(scal)

    @jax.jit
    def forward(x):
        xr = x.reshape(R, T).astype(jnp.float32)
        xp = jnp.pad(xr, ((0, 0), (1, 1)))                # conv0 padding = 1
        # 10 stride-8 phase slabs, columns permuted so that MaxPool1 window
        # member mm of output l' lands at column mm*L2 + l'.  Pure layout
        # plumbing fused by XLA; all conv arithmetic happens in-kernel.
        xs_nat = jnp.stack(
            [xp[:, m:m + 8 * (L1 - 1) + 1:8] for m in range(K0)], axis=0
        )                                                 # (10, R, 150)
        xs = (xs_nat.reshape(K0, R, L2, P1K)
              .transpose(0, 1, 3, 2)
              .reshape(K0, R, L1))                        # permuted columns
        # TODO(synk): if xprof shows this strided-relayout fusion rivaling the
        # kernel, pass the (R, 1202) padded input instead and do the phase
        # extraction in-kernel with strided pl.ds lane reads.
        return kern(xs, Cj, scalj)

    return forward


# ----------------------------------------------------------------------------
# Pure-JAX reference (direct conv / reduce_window semantics) for validation.
# ----------------------------------------------------------------------------
def reference_forward(x, params):
    bs, n_nodes, T = x.shape
    h = x.reshape(bs * n_nodes, 1, T).astype(jnp.float32)

    def conv1d(h, w, b, stride, padding):
        y = jax.lax.conv_general_dilated(
            h, w.reshape(1, 1, -1).astype(jnp.float32),
            window_strides=(stride,), padding=[(padding, padding)],
            dimension_numbers=("NCH", "OIH", "NCH"))
        return y + b

    def maxpool(h, k, stride, padding):
        return jax.lax.reduce_window(
            h, -jnp.inf, jax.lax.max,
            window_dimensions=(1, 1, k), window_strides=(1, 1, stride),
            padding=[(0, 0), (0, 0), (padding, padding)])

    h = jax.nn.relu(conv1d(h, params["w0"], params["b0"], 8, 1))
    h = jax.nn.relu(maxpool(h, 5, 5, 0))
    h = jax.nn.relu(conv1d(h, params["w2"], params["b2"], 3, 0))
    h = jax.nn.relu(maxpool(h, 3, 3, 1))
    h = jax.nn.relu(conv1d(h, params["w4"], params["b4"], 1, 0))
    feat = h.reshape(bs, n_nodes)
    logits = feat @ params["Wl"].T + params["bl"]
    return jax.nn.softmax(logits, axis=1)


# ----------------------------------------------------------------------------
if __name__ == "__main__":
    # The time-conv chain forces T so that lengths are 1200 -> 150 -> 30 -> 10
    # -> 4 -> 1 (matching GCNConv(30,30)/GCNConv(4,4) in the original module).
    bs, n_nodes, T = 2, 8, 1200

    key = jax.random.PRNGKey(0)
    kx, k0, k1, k2, k3, k4, k5, k6, k7 = jax.random.split(key, 9)

    x = jax.random.normal(kx, (bs, n_nodes, T), jnp.float32)

    params = {
        "w0": jax.random.normal(k0, (10,), jnp.float32) * 0.3,
        "b0": jax.random.normal(k1, (), jnp.float32) * 0.1,
        "w2": jax.random.normal(k2, (3,), jnp.float32) * 0.5,
        "b2": jax.random.normal(k3, (), jnp.float32) * 0.1,
        "w4": jax.random.normal(k4, (4,), jnp.float32) * 0.5,
        "b4": jax.random.normal(k5, (), jnp.float32) * 0.1,
        "Wl": jax.random.normal(k6, (3, n_nodes), jnp.float32) * 0.3,
        "bl": jax.random.normal(k7, (3,), jnp.float32) * 0.1,
    }

    forward = make_time_graph_net(params, bs, n_nodes, T)
    out = jax.block_until_ready(forward(x))

    ref = jax.block_until_ready(reference_forward(x, params))
    np.testing.assert_allclose(np.asarray(out), np.asarray(ref),
                               rtol=1e-4, atol=1e-4)
    assert out.shape == (bs, 3)

    print("KERNEL_OK")
</pallas_src>

<mosaic_0001>
module attributes {stable_mosaic.version = 11 : i64} {
  func.func @tgn_kernel(%arg0: memref<10x16x150xf32, #tpu.memory_space<vmem>>, %arg1: memref<40x12xf32, #tpu.memory_space<vmem>>, %arg2: memref<16xf32, #tpu.memory_space<smem>>, %arg3: memref<2x3xf32, #tpu.memory_space<vmem>>) attributes {dimension_semantics = [], scalar_prefetch = 0 : i64, scratch_operands = 0 : i64, tpu.core_type = #tpu.core_type<tc>} {
    %c0 = arith.constant 0 : index
    %0 = memref.load %arg2[%c0] : memref<16xf32, #tpu.memory_space<smem>>
    %c0_0 = arith.constant 0 : index
    %c0_1 = arith.constant 0 : index
    %c0_2 = arith.constant 0 : index
    %1 = vector.load %arg0[%c0_0, %c0_1, %c0_2] : memref<10x16x150xf32, #tpu.memory_space<vmem>>, vector<1x16x150xf32>
    %2 = vector.shape_cast %1 : vector<1x16x150xf32> to vector<16x150xf32>
    %3 = vector.broadcast %0 : f32 to vector<16x150xf32>
    %4 = arith.mulf %3, %2 : vector<16x150xf32>
    %c1 = arith.constant 1 : index
    %5 = memref.load %arg2[%c1] : memref<16xf32, #tpu.memory_space<smem>>
    %c1_3 = arith.constant 1 : index
    %c0_4 = arith.constant 0 : index
    %c0_5 = arith.constant 0 : index
    %6 = vector.load %arg0[%c1_3, %c0_4, %c0_5] : memref<10x16x150xf32, #tpu.memory_space<vmem>>, vector<1x16x150xf32>
    %7 = vector.shape_cast %6 : vector<1x16x150xf32> to vector<16x150xf32>
    %8 = vector.broadcast %5 : f32 to vector<16x150xf32>
    %9 = arith.mulf %8, %7 : vector<16x150xf32>
    %c2 = arith.constant 2 : index
    %10 = memref.load %arg2[%c2] : memref<16xf32, #tpu.memory_space<smem>>
    %c2_6 = arith.constant 2 : index
    %c0_7 = arith.constant 0 : index
    %c0_8 = arith.constant 0 : index
    %11 = vector.load %arg0[%c2_6, %c0_7, %c0_8] : memref<10x16x150xf32, #tpu.memory_space<vmem>>, vector<1x16x150xf32>
    %12 = vector.shape_cast %11 : vector<1x16x150xf32> to vector<16x150xf32>
    %13 = vector.broadcast %10 : f32 to vector<16x150xf32>
    %14 = arith.mulf %13, %12 : vector<16x150xf32>
    %c3 = arith.constant 3 : index
    %15 = memref.load %arg2[%c3] : memref<16xf32, #tpu.memory_space<smem>>
    %c3_9 = arith.constant 3 : index
    %c0_10 = arith.constant 0 : index
    %c0_11 = arith.constant 0 : index
    %16 = vector.load %arg0[%c3_9, %c0_10, %c0_11] : memref<10x16x150xf32, #tpu.memory_space<vmem>>, vector<1x16x150xf32>
    %17 = vector.shape_cast %16 : vector<1x16x150xf32> to vector<16x150xf32>
    %18 = vector.broadcast %15 : f32 to vector<16x150xf32>
    %19 = arith.mulf %18, %17 : vector<16x150xf32>
    %c4 = arith.constant 4 : index
    %20 = memref.load %arg2[%c4] : memref<16xf32, #tpu.memory_space<smem>>
    %c4_12 = arith.constant 4 : index
    %c0_13 = arith.constant 0 : index
    %c0_14 = arith.constant 0 : index
    %21 = vector.load %arg0[%c4_12, %c0_13, %c0_14] : memref<10x16x150xf32, #tpu.memory_space<vmem>>, vector<1x16x150xf32>
    %22 = vector.shape_cast %21 : vector<1x16x150xf32> to vector<16x150xf32>
    %23 = vector.broadcast %20 : f32 to vector<16x150xf32>
    %24 = arith.mulf %23, %22 : vector<16x150xf32>
    %c5 = arith.constant 5 : index
    %25 = memref.load %arg2[%c5] : memref<16xf32, #tpu.memory_space<smem>>
    %c5_15 = arith.constant 5 : index
    %c0_16 = arith.constant 0 : index
    %c0_17 = arith.constant 0 : index
    %26 = vector.load %arg0[%c5_15, %c0_16, %c0_17] : memref<10x16x150xf32, #tpu.memory_space<vmem>>, vector<1x16x150xf32>
    %27 = vector.shape_cast %26 : vector<1x16x150xf32> to vector<16x150xf32>
    %28 = vector.broadcast %25 : f32 to vector<16x150xf32>
    %29 = arith.mulf %28, %27 : vector<16x150xf32>
    %c6 = arith.constant 6 : index
    %30 = memref.load %arg2[%c6] : memref<16xf32, #tpu.memory_space<smem>>
    %c6_18 = arith.constant 6 : index
    %c0_19 = arith.constant 0 : index
    %c0_20 = arith.constant 0 : index
    %31 = vector.load %arg0[%c6_18, %c0_19, %c0_20] : memref<10x16x150xf32, #tpu.memory_space<vmem>>, vector<1x16x150xf32>
    %32 = vector.shape_cast %31 : vector<1x16x150xf32> to vector<16x150xf32>
    %33 = vector.broadcast %30 : f32 to vector<16x150xf32>
    %34 = arith.mulf %33, %32 : vector<16x150xf32>
    %c7 = arith.constant 7 : index
    %35 = memref.load %arg2[%c7] : memref<16xf32, #tpu.memory_space<smem>>
    %c7_21 = arith.constant 7 : index
    %c0_22 = arith.constant 0 : index
    %c0_23 = arith.constant 0 : index
    %36 = vector.load %arg0[%c7_21, %c0_22, %c0_23] : memref<10x16x150xf32, #tpu.memory_space<vmem>>, vector<1x16x150xf32>
    %37 = vector.shape_cast %36 : vector<1x16x150xf32> to vector<16x150xf32>
    %38 = vector.broadcast %35 : f32 to vector<16x150xf32>
    %39 = arith.mulf %38, %37 : vector<16x150xf32>
    %c8 = arith.constant 8 : index
    %40 = memref.load %arg2[%c8] : memref<16xf32, #tpu.memory_space<smem>>
    %c8_24 = arith.constant 8 : index
    %c0_25 = arith.constant 0 : index
    %c0_26 = arith.constant 0 : index
    %41 = vector.load %arg0[%c8_24, %c0_25, %c0_26] : memref<10x16x150xf32, #tpu.memory_space<vmem>>, vector<1x16x150xf32>
    %42 = vector.shape_cast %41 : vector<1x16x150xf32> to vector<16x150xf32>
    %43 = vector.broadcast %40 : f32 to vector<16x150xf32>
    %44 = arith.mulf %43, %42 : vector<16x150xf32>
    %c9 = arith.constant 9 : index
    %45 = memref.load %arg2[%c9] : memref<16xf32, #tpu.memory_space<smem>>
    %c9_27 = arith.constant 9 : index
    %c0_28 = arith.constant 0 : index
    %c0_29 = arith.constant 0 : index
    %46 = vector.load %arg0[%c9_27, %c0_28, %c0_29] : memref<10x16x150xf32, #tpu.memory_space<vmem>>, vector<1x16x150xf32>
    %47 = vector.shape_cast %46 : vector<1x16x150xf32> to vector<16x150xf32>
    %48 = vector.broadcast %45 : f32 to vector<16x150xf32>
    %49 = arith.mulf %48, %47 : vector<16x150xf32>
    %50 = arith.addf %4, %9 : vector<16x150xf32>
    %51 = arith.addf %14, %19 : vector<16x150xf32>
    %52 = arith.addf %24, %29 : vector<16x150xf32>
    %53 = arith.addf %34, %39 : vector<16x150xf32>
    %54 = arith.addf %44, %49 : vector<16x150xf32>
    %55 = arith.addf %50, %51 : vector<16x150xf32>
    %56 = arith.addf %52, %53 : vector<16x150xf32>
    %57 = arith.addf %55, %56 : vector<16x150xf32>
    %58 = arith.addf %57, %54 : vector<16x150xf32>
    %c10 = arith.constant 10 : index
    %59 = memref.load %arg2[%c10] : memref<16xf32, #tpu.memory_space<smem>>
    %60 = vector.broadcast %59 : f32 to vector<16x150xf32>
    %61 = arith.addf %58, %60 : vector<16x150xf32>
    %cst = arith.constant 0.000000e+00 : f32
    %62 = vector.broadcast %cst : f32 to vector<16x150xf32>
    %63 = arith.maximumf %61, %62 : vector<16x150xf32>
    %64 = vector.extract_strided_slice %63 {offsets = [0, 0], sizes = [16, 30], strides = [1, 1]} : vector<16x150xf32> to vector<16x30xf32>
    %65 = vector.extract_strided_slice %63 {offsets = [0, 30], sizes = [16, 30], strides = [1, 1]} : vector<16x150xf32> to vector<16x30xf32>
    %66 = arith.maximumf %64, %65 : vector<16x30xf32>
    %67 = vector.extract_strided_slice %63 {offsets = [0, 60], sizes = [16, 30], strides = [1, 1]} : vector<16x150xf32> to vector<16x30xf32>
    %68 = arith.maximumf %66, %67 : vector<16x30xf32>
    %69 = vector.extract_strided_slice %63 {offsets = [0, 90], sizes = [16, 30], strides = [1, 1]} : vector<16x150xf32> to vector<16x30xf32>
    %70 = arith.maximumf %68, %69 : vector<16x30xf32>
    %71 = vector.extract_strided_slice %63 {offsets = [0, 120], sizes = [16, 30], strides = [1, 1]} : vector<16x150xf32> to vector<16x30xf32>
    %72 = arith.maximumf %70, %71 : vector<16x30xf32>
    %c0_30 = arith.constant 0 : index
    %c0_31 = arith.constant 0 : index
    %73 = vector.load %arg1[%c0_30, %c0_31] : memref<40x12xf32, #tpu.memory_space<vmem>>, vector<30x12xf32>
    %c30 = arith.constant 30 : index
    %c0_32 = arith.constant 0 : index
    %74 = vector.load %arg1[%c30, %c0_32] : memref<40x12xf32, #tpu.memory_space<vmem>>, vector<1x12xf32>
    %cst_33 = arith.constant dense<0.000000e+00> : vector<16x12xf32>
    %75 = tpu.matmul %72, %73, %cst_33 {dimension_numbers = #tpu.dot_dimension_numbers<[1], [0], [0], [1], [0, 0, 1, 1], [], []>} : vector<16x30xf32>, vector<30x12xf32>, vector<16x12xf32> -> vector<16x12xf32>
    %76 = vector.broadcast %74 : vector<1x12xf32> to vector<16x12xf32>
    %77 = arith.addf %75, %76 : vector<16x12xf32>
    %cst_34 = arith.constant 0.000000e+00 : f32
    %78 = vector.broadcast %cst_34 : f32 to vector<16x12xf32>
    %79 = arith.maximumf %77, %78 : vector<16x12xf32>
    %80 = vector.extract_strided_slice %79 {offsets = [0, 0], sizes = [16, 4], strides = [1, 1]} : vector<16x12xf32> to vector<16x4xf32>
    %81 = vector.extract_strided_slice %79 {offsets = [0, 4], sizes = [16, 4], strides = [1, 1]} : vector<16x12xf32> to vector<16x4xf32>
    %82 = arith.maximumf %80, %81 : vector<16x4xf32>
    %83 = vector.extract_strided_slice %79 {offsets = [0, 8], sizes = [16, 4], strides = [1, 1]} : vector<16x12xf32> to vector<16x4xf32>
    %84 = arith.maximumf %82, %83 : vector<16x4xf32>
    %c11 = arith.constant 11 : index
    %85 = memref.load %arg2[%c11] : memref<16xf32, #tpu.memory_space<smem>>
    %86 = vector.extract_strided_slice %84 {offsets = [0, 0], sizes = [16, 1], strides = [1, 1]} : vector<16x4xf32> to vector<16x1xf32>
    %87 = vector.broadcast %85 : f32 to vector<16x1xf32>
    %88 = arith.mulf %87, %86 : vector<16x1xf32>
    %c12 = arith.constant 12 : index
    %89 = memref.load %arg2[%c12] : memref<16xf32, #tpu.memory_space<smem>>
    %90 = vector.extract_strided_slice %84 {offsets = [0, 1], sizes = [16, 1], strides = [1, 1]} : vector<16x4xf32> to vector<16x1xf32>
    %91 = vector.broadcast %89 : f32 to vector<16x1xf32>
    %92 = arith.mulf %91, %90 : vector<16x1xf32>
    %93 = arith.addf %88, %92 : vector<16x1xf32>
    %c13 = arith.constant 13 : index
    %94 = memref.load %arg2[%c13] : memref<16xf32, #tpu.memory_space<smem>>
    %95 = vector.extract_strided_slice %84 {offsets = [0, 2], sizes = [16, 1], strides = [1, 1]} : vector<16x4xf32> to vector<16x1xf32>
    %96 = vector.broadcast %94 : f32 to vector<16x1xf32>
    %97 = arith.mulf %96, %95 : vector<16x1xf32>
    %98 = arith.addf %93, %97 : vector<16x1xf32>
    %c14 = arith.constant 14 : index
    %99 = memref.load %arg2[%c14] : memref<16xf32, #tpu.memory_space<smem>>
    %100 = vector.extract_strided_slice %84 {offsets = [0, 3], sizes = [16, 1], strides = [1, 1]} : vector<16x4xf32> to vector<16x1xf32>
    %101 = vector.broadcast %99 : f32 to vector<16x1xf32>
    %102 = arith.mulf %101, %100 : vector<16x1xf32>
    %103 = arith.addf %98, %102 : vector<16x1xf32>
    %c15 = arith.constant 15 : index
    %104 = memref.load %arg2[%c15] : memref<16xf32, #tpu.memory_space<smem>>
    %105 = vector.broadcast %104 : f32 to vector<16x1xf32>
    %106 = arith.addf %103, %105 : vector<16x1xf32>
    %cst_35 = arith.constant 0.000000e+00 : f32
    %107 = vector.broadcast %cst_35 : f32 to vector<16x1xf32>
    %108 = arith.maximumf %106, %107 : vector<16x1xf32>
    %c32 = arith.constant 32 : index
    %c0_36 = arith.constant 0 : index
    %109 = vector.load %arg1[%c32, %c0_36] : memref<40x12xf32, #tpu.memory_space<vmem>>, vector<8x3xf32>
    %c31 = arith.constant 31 : index
    %c0_37 = arith.constant 0 : index
    %110 = vector.load %arg1[%c31, %c0_37] : memref<40x12xf32, #tpu.memory_space<vmem>>, vector<1x3xf32>
    %111 = vector.extract_strided_slice %108 {offsets = [0, 0], sizes = [8, 1], strides = [1, 1]} : vector<16x1xf32> to vector<8x1xf32>
    %112 = vector.broadcast %111 : vector<8x1xf32> to vector<8x3xf32>
    %113 = arith.mulf %112, %109 : vector<8x3xf32>
    %cst_38 = arith.constant dense<0.000000e+00> : vector<3xf32>
    %114 = vector.multi_reduction <add>, %113, %cst_38 [0] : vector<8x3xf32> to vector<3xf32>
    %115 = vector.shape_cast %114 : vector<3xf32> to vector<1x3xf32>
    %116 = arith.addf %115, %110 : vector<1x3xf32>
    %cst_39 = arith.constant dense<0xFF800000> : vector<1xf32>
    %117 = vector.multi_reduction <maximumf>, %116, %cst_39 [1] : vector<1x3xf32> to vector<1xf32>
    %118 = vector.shape_cast %117 : vector<1xf32> to vector<1x1xf32>
    %119 = vector.broadcast %118 : vector<1x1xf32> to vector<1x3xf32>
    %120 = arith.subf %116, %119 : vector<1x3xf32>
    %121 = math.exp %120 : vector<1x3xf32>
    %cst_40 = arith.constant dense<0.000000e+00> : vector<1xf32>
    %122 = vector.multi_reduction <add>, %121, %cst_40 [1] : vector<1x3xf32> to vector<1xf32>
    %123 = vector.shape_cast %122 : vector<1xf32> to vector<1x1xf32>
    %124 = vector.broadcast %123 : vector<1x1xf32> to vector<1x3xf32>
    %125 = arith.divf %121, %124 : vector<1x3xf32>
    %c0_41 = arith.constant 0 : index
    %c0_42 = arith.constant 0 : index
    %126 = vector.load %arg3[%c0_41, %c0_42] : memref<2x3xf32, #tpu.memory_space<vmem>>, vector<1x3xf32>
    tpu.vector_store %arg3[%c0_41, %c0_42], %125 {strides = array<i32>} : memref<2x3xf32, #tpu.memory_space<vmem>>, vector<1x3xf32>,
    %127 = vector.extract_strided_slice %108 {offsets = [8, 0], sizes = [8, 1], strides = [1, 1]} : vector<16x1xf32> to vector<8x1xf32>
    %128 = vector.broadcast %127 : vector<8x1xf32> to vector<8x3xf32>
    %129 = arith.mulf %128, %109 : vector<8x3xf32>
    %cst_43 = arith.constant dense<0.000000e+00> : vector<3xf32>
    %130 = vector.multi_reduction <add>, %129, %cst_43 [0] : vector<8x3xf32> to vector<3xf32>
    %131 = vector.shape_cast %130 : vector<3xf32> to vector<1x3xf32>
    %132 = arith.addf %131, %110 : vector<1x3xf32>
    %cst_44 = arith.constant dense<0xFF800000> : vector<1xf32>
    %133 = vector.multi_reduction <maximumf>, %132, %cst_44 [1] : vector<1x3xf32> to vector<1xf32>
    %134 = vector.shape_cast %133 : vector<1xf32> to vector<1x1xf32>
    %135 = vector.broadcast %134 : vector<1x1xf32> to vector<1x3xf32>
    %136 = arith.subf %132, %135 : vector<1x3xf32>
    %137 = math.exp %136 : vector<1x3xf32>
    %cst_45 = arith.constant dense<0.000000e+00> : vector<1xf32>
    %138 = vector.multi_reduction <add>, %137, %cst_45 [1] : vector<1x3xf32> to vector<1xf32>
    %139 = vector.shape_cast %138 : vector<1xf32> to vector<1x1xf32>
    %140 = vector.broadcast %139 : vector<1x1xf32> to vector<1x3xf32>
    %141 = arith.divf %137, %140 : vector<1x3xf32>
    %c1_46 = arith.constant 1 : index
    %c0_47 = arith.constant 0 : index
    %142 = vector.load %arg3[%c1_46, %c0_47] : memref<2x3xf32, #tpu.memory_space<vmem>>, vector<1x3xf32>
    tpu.vector_store %arg3[%c1_46, %c0_47], %141 {strides = array<i32>} : memref<2x3xf32, #tpu.memory_space<vmem>>, vector<1x3xf32>,
    return
  }
}

</mosaic_0001>

<llo_original>
// kernel: forward.1
$region0: #{forward.1}
  #allocation0 [shape = 'u32[]', space=smem, size = 0x4, offset = 0x4, fixed_abs, tag = 'smem constant byte address 0x4 - core index']
  #allocation1 [shape = 'u32[144,128]{1,0:T(1,128)}', space=vmem, size = 0x12000, scoped, tag = 'internal scratch']
  %s0 = inlined_call_operand.vmem [shape: f32[10,16,150], index: 0, kind: input, shape index: {}]
  %s1 = inlined_call_operand.vmem [shape: f32[40,12], index: 1, kind: input, shape index: {}]
  %s2 = inlined_call_operand.vmem [shape: f32[16], index: 2, kind: input, shape index: {}]
  %s3 = inlined_call_operand.hbm [shape: f32[2,3], index: 3, kind: output, shape index: {}]
  %s4 = sld [smem:[#allocation0]]
  $region26: #{forward.1} parent=0
    _
  %s6 = ssub.s32 1, %s4
  %s7 = scalar_select 0, %s6, %s4
  $region1: #{forward.1} parent=0
    #allocation2 [shape = 'u8[512]{0}', space=smem, size = 0x200, scoped, tag = 'input window, operand 2, single buffered']
    #allocation3 [shape = 's32[1]{0}', space=sflag, size = 0x4, scoped, tag = 'scoped memory for forward.1']
    #allocation4 [shape = 's32[1]{0}', space=sflag, size = 0x4, scoped, tag = 'scoped memory for forward.1']
    #allocation5 [shape = 'u8[1024]{0}', space=vmem, size = 0x400, scoped, tag = 'output window, operand 0, single buffered']
    %8 = vsyncpa [#allocation4], 0
    %9 = vsyncpa [#allocation3], 0
    // Predicated region
    $region2: #{forward.1} parent=1 // pred_check
      _
    $region3: #{forward.1} parent=1 // pred_check_branch
      %11 = sbr.rel (0) target = $region5
    $region4: #{forward.1} parent=1 // pred_region
      _
    $region5: #{forward.1} parent=1 // pred_fallthru
      _
    // Predicated region
    $region6: #{forward.1} parent=1 // pred_check
      _
    $region7: #{forward.1} parent=1 // pred_check_branch
      %13 = sbr.rel (0) target = $region9
    $region8: #{forward.1} parent=1 // pred_region
      _
    $region9: #{forward.1} parent=1 // pred_fallthru
      _
    // Predicated region
    $region10: #{forward.1} parent=1 // pred_check
      _
    $region11: #{forward.1} parent=1 // pred_check_branch
      %15 = sbr.rel (0) target = $region13
    $region12: #{forward.1} parent=1 // pred_region
      %s17 = ssub.s32 16, 16
      %18 = vsyncadd [#allocation4], %s17
      %s20 = sshll.u32 %s2, 4
      %s21 = int_to_ptr.vmem [resolvable:$true] %s20
      %23 = dma.vmem_to_smem %s21, 16, [#allocation2], [#allocation4]
    $region13: #{forward.1} parent=1 // pred_fallthru
      _
    // Predicated region
    $region14: #{forward.1} parent=1 // pred_check
      _
    $region15: #{forward.1} parent=1 // pred_check_branch
      %25 = sbr.rel (0) target = $region17
    $region16: #{forward.1} parent=1 // pred_region
      %26 = dma.done [#allocation4], 16
    $region17: #{forward.1} parent=1 // pred_fallthru
      _
    %27 = sfence
    %s28 = sld [smem:[#allocation2]]
    %v29 = vld [vmem:[%s0] sm:$0xff]
    %v30 = vld [vmem:[%s0 + $0x8] sm:$0xff]
    %v31 = vld [vmem:[%s0 + $0x10] sm:$0xff]
    %v32 = vld [vmem:[%s0 + $0x18] sm:$0xff]
    %v33 = vstv %s28
    %v34 = vmul.f32 %v33, %v29
    %v35 = vmul.f32 %v33, %v30
    %v36 = vmul.f32 %v33, %v31
    %v37 = vmul.f32 %v33, %v32
    %s38 = sld [smem:[#allocation2 + $0x1]]
    %s39 = scalar_lea.vmem %s0, 32
    %v40 = vld [vmem:[%s39] sm:$0xff]
    %v41 = vld [vmem:[%s39 + $0x8] sm:$0xff]
    %v42 = vld [vmem:[%s39 + $0x10] sm:$0xff]
    %v43 = vld [vmem:[%s39 + $0x18] sm:$0xff]
    %v44 = vstv %s38
    %v45 = vmul.f32 %v44, %v40
    %v46 = vmul.f32 %v44, %v41
    %v47 = vmul.f32 %v44, %v42
    %v48 = vmul.f32 %v44, %v43
    %s49 = sld [smem:[#allocation2 + $0x2]]
    %s50 = scalar_lea.vmem %s0, 64
    %v51 = vld [vmem:[%s50] sm:$0xff]
    %v52 = vld [vmem:[%s50 + $0x8] sm:$0xff]
    %v53 = vld [vmem:[%s50 + $0x10] sm:$0xff]
    %v54 = vld [vmem:[%s50 + $0x18] sm:$0xff]
    %v55 = vstv %s49
    %v56 = vmul.f32 %v55, %v51
    %v57 = vmul.f32 %v55, %v52
    %v58 = vmul.f32 %v55, %v53
    %v59 = vmul.f32 %v55, %v54
    %s60 = sld [smem:[#allocation2 + $0x3]]
    %s61 = scalar_lea.vmem %s0, 96
    %v62 = vld [vmem:[%s61] sm:$0xff]
    %v63 = vld [vmem:[%s61 + $0x8] sm:$0xff]
    %v64 = vld [vmem:[%s61 + $0x10] sm:$0xff]
    %v65 = vld [vmem:[%s61 + $0x18] sm:$0xff]
    %v66 = vstv %s60
    %v67 = vmul.f32 %v66, %v62
    %v68 = vmul.f32 %v66, %v63
    %v69 = vmul.f32 %v66, %v64
    %v70 = vmul.f32 %v66, %v65
    %s71 = sld [smem:[#allocation2 + $0x4]]
    %s72 = scalar_lea.vmem %s0, 128
    %v73 = vld [vmem:[%s72] sm:$0xff]
    %v74 = vld [vmem:[%s72 + $0x8] sm:$0xff]
    %v75 = vld [vmem:[%s72 + $0x10] sm:$0xff]
    %v76 = vld [vmem:[%s72 + $0x18] sm:$0xff]
    %v77 = vstv %s71
    %v78 = vmul.f32 %v77, %v73
    %v79 = vmul.f32 %v77, %v74
    %v80 = vmul.f32 %v77, %v75
    %v81 = vmul.f32 %v77, %v76
    %s82 = sld [smem:[#allocation2 + $0x5]]
    %s83 = scalar_lea.vmem %s0, 160
    %v84 = vld [vmem:[%s83] sm:$0xff]
    %v85 = vld [vmem:[%s83 + $0x8] sm:$0xff]
    %v86 = vld [vmem:[%s83 + $0x10] sm:$0xff]
    %v87 = vld [vmem:[%s83 + $0x18] sm:$0xff]
    %v88 = vstv %s82
    %v89 = vmul.f32 %v88, %v84
    %v90 = vmul.f32 %v88, %v85
    %v91 = vmul.f32 %v88, %v86
    %v92 = vmul.f32 %v88, %v87
    %s93 = sld [smem:[#allocation2 + $0x6]]
    %s94 = scalar_lea.vmem %s0, 192
    %v95 = vld [vmem:[%s94] sm:$0xff]
    %v96 = vld [vmem:[%s94 + $0x8] sm:$0xff]
    %v97 = vld [vmem:[%s94 + $0x10] sm:$0xff]
    %v98 = vld [vmem:[%s94 + $0x18] sm:$0xff]
    %v99 = vstv %s93
    %v100 = vmul.f32 %v99, %v95
    %v101 = vmul.f32 %v99, %v96
    %v102 = vmul.f32 %v99, %v97
    %v103 = vmul.f32 %v99, %v98
    %s104 = sld [smem:[#allocation2 + $0x7]]
    %s105 = scalar_lea.vmem %s0, 224
    %v106 = vld [vmem:[%s105] sm:$0xff]
    %v107 = vld [vmem:[%s105 + $0x8] sm:$0xff]
    %v108 = vld [vmem:[%s105 + $0x10] sm:$0xff]
    %v109 = vld [vmem:[%s105 + $0x18] sm:$0xff]
    %v110 = vstv %s104
    %v111 = vmul.f32 %v110, %v106
    %v112 = vmul.f32 %v110, %v107
    %v113 = vmul.f32 %v110, %v108
    %v114 = vmul.f32 %v110, %v109
    %s115 = sld [smem:[#allocation2 + $0x8]]
    %s116 = scalar_lea.vmem %s0, 256
    %v117 = vld [vmem:[%s116] sm:$0xff]
    %v118 = vld [vmem:[%s116 + $0x8] sm:$0xff]
    %v119 = vld [vmem:[%s116 + $0x10] sm:$0xff]
    %v120 = vld [vmem:[%s116 + $0x18] sm:$0xff]
    %v121 = vstv %s115
    %v122 = vmul.f32 %v121, %v117
    %v123 = vmul.f32 %v121, %v118
    %v124 = vmul.f32 %v121, %v119
    %v125 = vmul.f32 %v121, %v120
    %s126 = sld [smem:[#allocation2 + $0x9]]
    %s127 = scalar_lea.vmem %s0, 288
    %v128 = vld [vmem:[%s127] sm:$0xff]
    %v129 = vld [vmem:[%s127 + $0x8] sm:$0xff]
    %v130 = vld [vmem:[%s127 + $0x10] sm:$0xff]
    %v131 = vld [vmem:[%s127 + $0x18] sm:$0xff]
    %v132 = vstv %s126
    %v133 = vmul.f32 %v132, %v128
    %v134 = vmul.f32 %v132, %v129
    %v135 = vmul.f32 %v132, %v130
    %v136 = vmul.f32 %v132, %v131
    %v137 = vadd.f32 %v34, %v45
    %v138 = vadd.f32 %v35, %v46
    %v139 = vadd.f32 %v36, %v47
    %v140 = vadd.f32 %v37, %v48
    %v141 = vadd.f32 %v56, %v67
    %v142 = vadd.f32 %v57, %v68
    %v143 = vadd.f32 %v58, %v69
    %v144 = vadd.f32 %v59, %v70
    %v145 = vadd.f32 %v78, %v89
    %v146 = vadd.f32 %v79, %v90
    %v147 = vadd.f32 %v80, %v91
    %v148 = vadd.f32 %v81, %v92
    %v149 = vadd.f32 %v100, %v111
    %v150 = vadd.f32 %v101, %v112
    %v151 = vadd.f32 %v102, %v113
    %v152 = vadd.f32 %v103, %v114
    %v153 = vadd.f32 %v122, %v133
    %v154 = vadd.f32 %v123, %v134
    %v155 = vadd.f32 %v124, %v135
    %v156 = vadd.f32 %v125, %v136
    %v157 = vadd.f32 %v137, %v141
    %v158 = vadd.f32 %v138, %v142
    %v159 = vadd.f32 %v139, %v143
    %v160 = vadd.f32 %v140, %v144
    %v161 = vadd.f32 %v145, %v149
    %v162 = vadd.f32 %v146, %v150
    %v163 = vadd.f32 %v147, %v151
    %v164 = vadd.f32 %v148, %v152
    %v165 = vadd.f32 %v157, %v161
    %v166 = vadd.f32 %v158, %v162
    %v167 = vadd.f32 %v159, %v163
    %v168 = vadd.f32 %v160, %v164
    %v169 = vadd.f32 %v165, %v153
    %v170 = vadd.f32 %v166, %v154
    %v171 = vadd.f32 %v167, %v155
    %v172 = vadd.f32 %v168, %v156
    %s173 = sld [smem:[#allocation2 + $0xa]]
    %v174 = vstv %s173
    %v175 = vadd.f32 %v169, %v174
    %v176 = vadd.f32 %v170, %v174
    %v177 = vadd.f32 %v171, %v174
    %v178 = vadd.f32 %v172, %v174
    %v179 = vmax.f32 %v175, 0.0
    %v180 = vmax.f32 %v176, 0.0
    %v181 = vmax.f32 %v177, 0.0
    %v182 = vmax.f32 %v178, 0.0
    %185 = vrot.lane.b32.xlu0 %v179, 98
    %v186 = vpop.permute.xlu0 %185
    %187 = vrot.lane.b32.xlu0 %v181, 98
    %v188 = vpop.permute.xlu0 %187
    %v191 = vmax.f32 %v179, %v186
    %v192 = vmax.f32 %v181, %v188
    %193 = vrot.lane.b32.xlu0 %v179, 68
    %v194 = vpop.permute.xlu0 %193
    %195 = vrot.lane.b32.xlu0 %v181, 68
    %v196 = vpop.permute.xlu0 %195
    %v199 = vmax.f32 %v191, %v194
    %v200 = vmax.f32 %v192, %v196
    %201 = vrot.lane.b32.xlu0 %v179, 38
    %v202 = vpop.permute.xlu0 %201
    %203 = vrot.lane.b32.xlu0 %v181, 38
    %v204 = vpop.permute.xlu0 %203
    %v207 = vmax.f32 %v199, %v202
    %v208 = vmax.f32 %v200, %v204
    %211 = vrot.lane.b32.xlu0 %v179, 8
    %v212 = vpop.permute.xlu0 %211
    %213 = vrot.lane.b32.xlu0 %v180, 8
    %v214 = vpop.permute.xlu0 %213
    %215 = vrot.lane.b32.xlu0 %v181, 8
    %v216 = vpop.permute.xlu0 %215
    %217 = vrot.lane.b32.xlu0 %v182, 8
    %v218 = vpop.permute.xlu0 %217
    %vm219 = vcmask 64512
    %v220 = vsel %vm219, %v212, %v214
    %v221 = vsel %vm219, %v216, %v218
    %v224 = vmax.f32 %v207, %v220
    %v225 = vmax.f32 %v208, %v221
    %v226 = vld [vmem:[%s1] sm:$0xff]
    %v227 = vld [vmem:[%s1 + $0x8] sm:$0xff]
    %v228 = vld [vmem:[%s1 + $0x10] sm:$0xff]
    %v229 = vld [vmem:[%s1 + $0x18] sm:$0x3f]
    %v230 = vld [vmem:[%s1 + $0x1e] sm:$0x1]
    %v231 = vlaneseq
    %v232 = vshrl.u32 %v231, 7
    %v233 = vsub.s32 0, %v232
    %v234 = vrot.slane %v230, %v233
    %vm235 = vcmask 244736
    %v237 = vsel %vm235, %v224, 0
    %v240 = vsel %vm235, %v225, 0
    %vm242 = vcmask 1045504
    %v244 = vsel %vm242, %v229, 0
    %246 = vmatprep.subr.mxu0 0.0
    %247 = vmatpush1.msra.mxu0 %v226
    %248 = vmatprep.subr.mxu0 0.0
    %249 = vmatpush1.msra.mxu0 %v227
    %250 = vmatprep.subr.mxu0 0.0
    %251 = vmatpush1.msra.mxu0 %v228
    %252 = vmatprep.subr.mxu0 0.0
    %253 = vmatpush1.msra.mxu0 %v244
    %254 = vmatprep.subr.mxu0 0.0
    %255 = vmatpush1.msra.mxu0 0.0
    %256 = vmatprep.subr.mxu0 0.0
    %257 = vmatpush1.msra.mxu0 0.0
    %258 = vmatprep.subr.mxu0 0.0
    %259 = vmatpush1.msra.mxu0 0.0
    %260 = vmatprep.subr.mxu0 0.0
    %261 = vmatpush1.msra.mxu0 0.0
    %262 = vmatprep.subr.mxu0 0.0
    %263 = vmatpush1.msra.mxu0 0.0
    %264 = vmatprep.subr.mxu0 0.0
    %265 = vmatpush1.msra.mxu0 0.0
    %266 = vmatprep.subr.mxu0 0.0
    %267 = vmatpush1.msra.mxu0 0.0
    %268 = vmatprep.subr.mxu0 0.0
    %269 = vmatpush1.msra.mxu0 0.0
    %270 = vmatprep.subr.mxu0 0.0
    %271 = vmatpush1.msra.mxu0 0.0
    %272 = vmatprep.subr.mxu0 0.0
    %273 = vmatpush1.msra.mxu0 0.0
    %274 = vmatprep.subr.mxu0 0.0
    %275 = vmatpush1.msra.mxu0 0.0
    %276 = vmatprep.subr.mxu0 0.0
    %277 = vmatpush1.msra.mxu0 0.0
    %278 = vmatprep.subr.mxu0 0.0
    %279 = vmatpush1.msra.mxu0 0.0
    %280 = vmatprep.subr.mxu0 0.0
    %281 = vmatpush1.msra.mxu0 0.0
    %282 = vmatprep.subr.mxu0 0.0
    %283 = vmatpush1.msra.mxu0 0.0
    %284 = vmatprep.subr.mxu0 0.0
    %285 = vmatpush1.msra.mxu0 0.0
    %286 = vmatprep.subr.mxu0 0.0
    %287 = vmatpush1.msra.mxu0 0.0
    %288 = vmatprep.subr.mxu0 0.0
    %289 = vmatpush1.msra.mxu0 0.0
    %290 = vmatprep.subr.mxu0 0.0
    %291 = vmatpush1.msra.mxu0 0.0
    %292 = vmatprep.subr.mxu0 0.0
    %293 = vmatpush1.msra.mxu0 0.0
    %294 = vmatprep.subr.mxu0 0.0
    %295 = vmatpush1.msra.mxu0 0.0
    %296 = vmatprep.subr.mxu0 0.0
    %297 = vmatpush1.msra.mxu0 0.0
    %298 = vmatprep.subr.mxu0 0.0
    %299 = vmatpush1.msra.mxu0 0.0
    %300 = vmatprep.subr.mxu0 0.0
    %301 = vmatpush1.msra.mxu0 0.0
    %302 = vmatprep.subr.mxu0 0.0
    %303 = vmatpush1.msra.mxu0 0.0
    %304 = vmatprep.subr.mxu0 0.0
    %305 = vmatpush1.msra.mxu0 0.0
    %306 = vmatprep.subr.mxu0 0.0
    %307 = vmatpush1.msra.mxu0 0.0
    %308 = vmatprep.subr.mxu0 0.0
    %309 = vmatpush1.msra.mxu0 0.0
    %310 = vmatprep.mubr.f32.mxu0 0.0
    %311 = vmatmul.mubr.f32.gmra.mrb[0].mxu0 %v237
    %v312 = vpop.f32.mrb[0].mxu0
    %v313 = vadd.f32 %v234, %v312
    %v314 = vpop.f32.mrb[0].mxu0
    %315 = vmatprep.mubr.f32.mxu0 0.0
    %316 = vmatmul.mubr.f32.gmra.mrb[0].mxu0 %v240
    %v317 = vpop.f32.mrb[0].mxu0
    %v318 = vadd.f32 %v234, %v317
    %v319 = vpop.f32.mrb[0].mxu0
    %320 = vdwg.mxu0
    %v321 = vmax.f32 %v313, 0.0
    %v322 = vmax.f32 %v318, 0.0
    %325 = vrot.lane.b32.xlu0 %v321, 124
    %v326 = vpop.permute.xlu0 %325
    %327 = vrot.lane.b32.xlu0 %v322, 124
    %v328 = vpop.permute.xlu0 %327
    %v331 = vmax.f32 %v321, %v326
    %v332 = vmax.f32 %v322, %v328
    %333 = vrot.lane.b32.xlu0 %v321, 120
    %v334 = vpop.permute.xlu0 %333
    %335 = vrot.lane.b32.xlu0 %v322, 120
    %v336 = vpop.permute.xlu0 %335
    %v339 = vmax.f32 %v331, %v334
    %v340 = vmax.f32 %v332, %v336
    %s341 = sld [smem:[#allocation2 + $0xb]]
    %v342 = vstv %s341
    %v343 = vmul.f32 %v342, %v339
    %v344 = vmul.f32 %v342, %v340
    %s345 = sld [smem:[#allocation2 + $0xc]]
    %v346 = vstv %s345
    %v347 = vmul.f32 %v346, %v339
    %v348 = vmul.f32 %v346, %v340
    %351 = vrot.lane.b32.xlu0 %v347, 127
    %v352 = vpop.permute.xlu0 %351
    %353 = vrot.lane.b32.xlu0 %v348, 127
    %v354 = vpop.permute.xlu0 %353
    %v357 = vadd.f32 %v343, %v352
    %v358 = vadd.f32 %v344, %v354
    %s359 = sld [smem:[#allocation2 + $0xd]]
    %v360 = vstv %s359
    %v361 = vmul.f32 %v360, %v339
    %v362 = vmul.f32 %v360, %v340
    %365 = vrot.lane.b32.xlu0 %v361, 126
    %v366 = vpop.permute.xlu0 %365
    %367 = vrot.lane.b32.xlu0 %v362, 126
    %v368 = vpop.permute.xlu0 %367
    %v371 = vadd.f32 %v357, %v366
    %v372 = vadd.f32 %v358, %v368
    %s373 = sld [smem:[#allocation2 + $0xe]]
    %v374 = vstv %s373
    %v375 = vmul.f32 %v374, %v339
    %v376 = vmul.f32 %v374, %v340
    %379 = vrot.lane.b32.xlu0 %v375, 125
    %v380 = vpop.permute.xlu0 %379
    %381 = vrot.lane.b32.xlu0 %v376, 125
    %v382 = vpop.permute.xlu0 %381
    %v385 = vadd.f32 %v371, %v380
    %v386 = vadd.f32 %v372, %v382
    %s387 = sld [smem:[#allocation2 + $0xf]]
    %v388 = vstv %s387
    %v389 = vadd.f32 %v385, %v388
    %v390 = vadd.f32 %v386, %v388
    %v391 = vmax.f32 %v389, 0.0
    %v392 = vmax.f32 %v390, 0.0
    %v393 = vld [vmem:[%s1 + $0x20] sm:$0xff]
    %v394 = vld [vmem:[%s1 + $0x1f] sm:$0x1]
    %396 = vset.pattern.permute.xlu0 0
    %397 = vperm.xlu0 %396, %v391
    %v398 = vpop.permute.xlu0 %397
    %v400 = vmul.f32 %v398, %v393
    %vm401 = vcmask 23552
    %v402 = vsel %vm401, %v400, 0.0
    %v403 = vrot.slane %v402, 4
    %v404 = vadd.f32 %v402, %v403
    %v405 = vrot.slane %v404, 2
    %v406 = vadd.f32 %v404, %v405
    %v407 = vrot.slane %v406, 1
    %v408 = vadd.f32 %v406, %v407
    %v409 = vadd.f32 %v408, %v394
    %vm410 = vcmask 16384
    %v411 = vsel %vm410, %v409, -inf
    %412 = vmax.xlane.f32.xlu0 %v411
    %v413 = vpop.xlane.xlu0 %412
    %v414 = vsub.f32 %v409, %v413
    %v415 = vmul.f32 %v414, 1.442695
    %v416 = vpow.pop %v415
    %v417 = vsel %vm410, %v416, 0.0
    %418 = vadd.xlane.f32.xlu0 %v417
    %v419 = vpop.xlane.xlu0 %418
    %v420 = vrcp.pop %v419
    %v421 = vmul.f32 %v416, %v420
    %422 = vst.msk [vmem:[#allocation5] sm:$0x1] %vm410, %v421
    %424 = vset.pattern.permute.xlu0 0
    %425 = vperm.xlu0 %424, %v392
    %v426 = vpop.permute.xlu0 %425
    %v428 = vmul.f32 %v426, %v393
    %v429 = vsel %vm401, %v428, 0.0
    %v430 = vrot.slane %v429, 4
    %v431 = vadd.f32 %v429, %v430
    %v432 = vrot.slane %v431, 2
    %v433 = vadd.f32 %v431, %v432
    %v434 = vrot.slane %v433, 1
    %v435 = vadd.f32 %v433, %v434
    %v436 = vadd.f32 %v435, %v394
    %v437 = vsel %vm410, %v436, -inf
    %438 = vmax.xlane.f32.xlu0 %v437
    %v439 = vpop.xlane.xlu0 %438
    %v440 = vsub.f32 %v436, %v439
    %v441 = vmul.f32 %v440, 1.442695
    %v442 = vpow.pop %v441
    %v443 = vsel %vm410, %v442, 0.0
    %444 = vadd.xlane.f32.xlu0 %v443
    %v445 = vpop.xlane.xlu0 %444
    %v446 = vrcp.pop %v445
    %v447 = vmul.f32 %v442, %v446
    %448 = vst.msk [vmem:[#allocation5 + $0x1] sm:$0x1] %vm410, %v447
    // Predicated region
    $region18: #{forward.1} parent=1 // pred_check
      _
    $region19: #{forward.1} parent=1 // pred_check_branch
      %450 = sbr.rel (0) target = $region21
    $region20: #{forward.1} parent=1 // pred_region
      %s452 = ssub.s32 32, 32
      %453 = vsyncadd [#allocation3], %s452
      %s455 = sshll.u32 [#allocation5], 4
      %s456 = int_to_ptr.vmem [resolvable:$true] %s455
      %458 = dma.vmem_to_hbm [thread:$0]  %s456, 32, %s3, [#allocation3]
    $region21: #{forward.1} parent=1 // pred_fallthru
      _
    // Predicated region
    $region22: #{forward.1} parent=1 // pred_check
      _
    $region23: #{forward.1} parent=1 // pred_check_branch
      %460 = sbr.rel (0) target = $region25
    $region24: #{forward.1} parent=1 // pred_region
      %461 = dma.done [#allocation3], 32
    $region25: #{forward.1} parent=1 // pred_fallthru
      _
    %462 = vsyncpa [#allocation3], 1
    %463 = vsyncpa [#allocation4], 1

</llo_original>
